<compile_context>
chip_gen: v5e
topology: v5e:2x2
jax: 0.10.0
libtpu: 0.0.40
codegen_flags: <defaults>
</compile_context>

<pallas_src>
import math

import jax
import jax.numpy as jnp
from jax.experimental import pallas as pl
from jax.experimental.pallas import tpu as pltpu


def _standardize_kernel(x_ref, stats_ref, o_ref):
    # x_ref:     (tile_rows, f_tile) tile of (packed) node features
    # stats_ref: (2, f_tile) f32 — row 0 = 1/std (scale), row 1 = -mean/std (shift)
    x = x_ref[...].astype(jnp.float32)
    scale = stats_ref[0:1, :]
    shift = stats_ref[1:2, :]
    o_ref[...] = (x * scale + shift).astype(o_ref.dtype)


def pyg_standardize(x: jax.Array, mean: jax.Array, std: jax.Array,
                    *, max_tile_bytes: int = 4 * 1024 * 1024,
                    donate_x: bool = False) -> jax.Array:
    """Apply (x - mean) / std featurewise over node features x of shape (N, F)."""
    n, f = x.shape
    out_dtype = x.dtype
    itemsize = jnp.dtype(out_dtype).itemsize

    # ---- lane-packing decision ------------------------------------------------
    k = 128 // math.gcd(f, 128)               # nodes packed per row (1 if F%128==0)
    if k > 1 and n % k != 0:
        # Packing here would need a pad (and an output slice) — each a full
        # extra HBM pass. Only pay that when unpacked lanes would be <50% used.
        lane_util = f / (((f + 127) // 128) * 128)
        if lane_util >= 0.5:
            k = 1

    if k > 1 and n % k != 0:
        pad_rows = k - n % k                   # <= 127 rows, only on narrow-F path
        x_in = jnp.pad(x, ((0, pad_rows), (0, 0)))
        n_in = n + pad_rows
    else:
        x_in = x
        n_in = n

    f_packed = f * k
    n_rows = n_in // k
    x_packed = x_in.reshape(n_rows, f_packed)  # contiguous reshape (no data motion)

    # ---- fused per-feature statistics (f32), repeated to the packed layout ----
    # TODO(synk): std == 0 silently yields inf/nan, same as the PyTorch module.
    scale = (1.0 / std.astype(jnp.float32)).reshape(f)
    shift = -(mean.astype(jnp.float32).reshape(f)) * scale
    stats = jnp.stack([jnp.tile(scale, (k,)), jnp.tile(shift, (k,))])  # (2, f_packed)

    # ---- tile sizing -----------------------------------------------------------
    # F tile: full width unless a single 8-row block would already blow the budget
    # (keeps v7x's 64 MiB/TC VMEM safe for very wide feature rows).
    if 8 * f_packed * itemsize > max_tile_bytes:
        f_tile = max(128, min(f_packed,
                              (max_tile_bytes // (8 * itemsize)) // 128 * 128))
    else:
        f_tile = f_packed

    # Row tile: as large as the budget allows (no hard row cap), but keep >= 2
    # grid steps along the row axis when possible so both v7x TensorCores work.
    bytes_per_row = max(f_tile * itemsize, 1)
    tile_rows = max(8, (max_tile_bytes // bytes_per_row) // 8 * 8)
    if n_rows < 8:
        tile_rows = max(1, n_rows)             # full-extent block for tiny graphs
    else:
        tile_rows = min(tile_rows, (n_rows // 8) * 8)
        if n_rows >= 16:
            tile_rows = min(tile_rows, max(8, (n_rows // 2 // 8) * 8))
        tile_rows = max(8, tile_rows)

    grid = (pl.cdiv(n_rows, tile_rows), pl.cdiv(f_packed, f_tile))
    vmem_limit = max(32 * 1024 * 1024, min(96 * 1024 * 1024, 6 * max_tile_bytes))

    out_packed = pl.pallas_call(
        _standardize_kernel,
        out_shape=jax.ShapeDtypeStruct((n_rows, f_packed), out_dtype),
        grid_spec=pltpu.PrefetchScalarGridSpec(
            num_scalar_prefetch=0,
            grid=grid,
            in_specs=[
                pl.BlockSpec((tile_rows, f_tile), lambda i, j: (i, j)),  # x tile
                pl.BlockSpec((2, f_tile), lambda i, j: (0, j)),          # scale/shift
            ],
            out_specs=pl.BlockSpec((tile_rows, f_tile), lambda i, j: (i, j)),
        ),
        compiler_params=pltpu.CompilerParams(
            dimension_semantics=("parallel", "parallel"),
            vmem_limit_bytes=vmem_limit,
        ),
        # In-place overwrite of x (matches PyTorch's g.x = ...); opt-in so the
        # caller's x buffer isn't clobbered when it is still needed.
        input_output_aliases={0: 0} if donate_x else {},
    )(x_packed, stats)

    out = out_packed.reshape(n_in, f)
    if n_in != n:
        out = out[:n]
    return out


if __name__ == "__main__":
    key = jax.random.PRNGKey(0)
    kx, km, ks = jax.random.split(key, 3)

    def _check(n, f, note):
        xs = jax.random.normal(kx, (n, f), dtype=jnp.float32) * 3.0 + 1.5
        mn = jax.random.normal(km, (f,), dtype=jnp.float32)
        sd = jax.random.uniform(ks, (f,), dtype=jnp.float32, minval=0.5, maxval=2.0)
        out = jax.block_until_ready(pyg_standardize(xs, mn, sd))
        ref = (xs - mn[None, :]) / sd[None, :]
        assert out.shape == ref.shape, f"shape mismatch ({note})"
        assert jnp.allclose(out, ref, atol=1e-4, rtol=1e-4), f"value mismatch ({note})"

    # Small graph matching the module's typical use: 16 atoms, 32 features.
    _check(16, 32, "packed lanes, aligned node count")
    # Ragged node count on the narrow-F path (small pad to a multiple of k=4).
    _check(37, 32, "packed lanes, ragged node count")
    # Lane-aligned F, multi-step row grid, no padding/slicing at all.
    _check(100, 128, "k=1, multi-step grid")
    # Good lane utilisation without packing -> raw layout, ragged tail block.
    _check(23, 200, "unpacked, ragged tail block")
    # Odd F -> pack 128 nodes per row.
    _check(10, 37, "odd F, pack by 128")

    print("KERNEL_OK")
</pallas_src>

<mosaic_0001>
module attributes {stable_mosaic.version = 11 : i64} {
  func.func @_standardize_kernel(%arg0: i32, %arg1: i32, %arg2: memref<4x128xf32, #tpu.memory_space<vmem>>, %arg3: memref<2x128xf32, #tpu.memory_space<vmem>>, %arg4: memref<4x128xf32, #tpu.memory_space<vmem>>) attributes {dimension_semantics = [#tpu.dimension_semantics<parallel>, #tpu.dimension_semantics<parallel>], iteration_bounds = array<i64: 1, 1>, scalar_prefetch = 0 : i64, scratch_operands = 0 : i64, tpu.core_type = #tpu.core_type<tc>, window_params = [{transform_indices = @transform_0, window_bounds = array<i64: 4, 128>}, {transform_indices = @transform_1, window_bounds = array<i64: 2, 128>}, {transform_indices = @transform_2, window_bounds = array<i64: 4, 128>}]} {
    %c0 = arith.constant 0 : index
    %c0_0 = arith.constant 0 : index
    %0 = vector.load %arg2[%c0, %c0_0] : memref<4x128xf32, #tpu.memory_space<vmem>>, vector<4x128xf32>
    %c0_1 = arith.constant 0 : index
    %c0_2 = arith.constant 0 : index
    %1 = vector.load %arg3[%c0_1, %c0_2] : memref<2x128xf32, #tpu.memory_space<vmem>>, vector<1x128xf32>
    %c1 = arith.constant 1 : index
    %c0_3 = arith.constant 0 : index
    %2 = vector.load %arg3[%c1, %c0_3] : memref<2x128xf32, #tpu.memory_space<vmem>>, vector<1x128xf32>
    %3 = vector.broadcast %1 : vector<1x128xf32> to vector<4x128xf32>
    %4 = arith.mulf %0, %3 : vector<4x128xf32>
    %5 = vector.broadcast %2 : vector<1x128xf32> to vector<4x128xf32>
    %6 = arith.addf %4, %5 : vector<4x128xf32>
    %c0_4 = arith.constant 0 : index
    %c0_5 = arith.constant 0 : index
    %7 = vector.load %arg4[%c0_4, %c0_5] : memref<4x128xf32, #tpu.memory_space<vmem>>, vector<4x128xf32>
    tpu.vector_store %arg4[%c0_4, %c0_5], %6 {strides = array<i32>} : memref<4x128xf32, #tpu.memory_space<vmem>>, vector<4x128xf32>,
    return
  }
  func.func @transform_0(%arg0: i32, %arg1: i32) -> (i32, i32) {
    %c0_i32 = arith.constant 0 : i32
    return %arg0, %arg1 : i32, i32
  }
  func.func @transform_1(%arg0: i32, %arg1: i32) -> (i32, i32) {
    %c0_i32 = arith.constant 0 : i32
    %c0_i32_0 = arith.constant 0 : i32
    return %c0_i32, %arg1 : i32, i32
  }
  func.func @transform_2(%arg0: i32, %arg1: i32) -> (i32, i32) {
    %c0_i32 = arith.constant 0 : i32
    return %arg0, %arg1 : i32, i32
  }
}

</mosaic_0001>

<llo_original>
// kernel: tpu_custom_call.1
$region0: #{tpu_custom_call.1}
  #allocation0 [shape = 'u32[]', space=smem, size = 0x4, offset = 0x4, fixed_abs, tag = 'smem constant byte address 0x4 - core index']
  #allocation1 [shape = 'u32[72,128]{1,0:T(1,128)}', space=vmem, size = 0x9000, scoped, tag = 'internal scratch']
  %s0 = inlined_call_operand.hbm [shape: f32[4,128], index: 0, kind: input, shape index: {}]
  %s1 = inlined_call_operand.hbm [shape: f32[2,128], index: 1, kind: input, shape index: {}]
  %s2 = inlined_call_operand.hbm [shape: f32[4,128], index: 2, kind: output, shape index: {}]
  %s3 = sld [smem:[#allocation0]]
  $region26: #{tpu_custom_call.1} parent=0
    _
  %s5 = ssub.s32 1, %s3
  %s6 = scalar_select 0, %s5, %s3
  $region1: #{tpu_custom_call.1} parent=0
    #allocation2 [shape = 'u8[2048]{0}', space=vmem, size = 0x800, scoped, tag = 'input window, operand 0, single buffered']
    #allocation3 [shape = 's32[1]{0}', space=sflag, size = 0x4, scoped, tag = 'scoped memory for tpu_custom_call.1']
    #allocation4 [shape = 's32[1]{0}', space=sflag, size = 0x4, scoped, tag = 'scoped memory for tpu_custom_call.1']
    #allocation5 [shape = 'u8[1024]{0}', space=vmem, size = 0x400, scoped, tag = 'input window, operand 1, single buffered']
    #allocation6 [shape = 's32[1]{0}', space=sflag, size = 0x4, scoped, tag = 'scoped memory for tpu_custom_call.1']
    #allocation7 [shape = 'u8[2048]{0}', space=vmem, size = 0x800, scoped, tag = 'output window, operand 0, single buffered']
    %7 = vsyncpa [#allocation3], 0
    %8 = vsyncpa [#allocation6], 0
    %9 = vsyncpa [#allocation4], 0
    // Predicated region
    $region2: #{tpu_custom_call.1} parent=1 // pred_check
      _
    $region3: #{tpu_custom_call.1} parent=1 // pred_check_branch
      %11 = sbr.rel (0) target = $region5
    $region4: #{tpu_custom_call.1} parent=1 // pred_region
      %13 = vsyncadd [#allocation3], 0
      %s15 = sshll.u32 %s0, 4
      %s16 = int_to_ptr.hbm [resolvable:$true] %s15
      %s17 = sshll.u32 [#allocation2], 4
      %s18 = int_to_ptr.vmem [resolvable:$true] %s17
      %20 = dma.hbm_to_vmem [thread:$0]  %s16, 64, %s18, [#allocation3]
    $region5: #{tpu_custom_call.1} parent=1 // pred_fallthru
      _
    // Predicated region
    $region6: #{tpu_custom_call.1} parent=1 // pred_check
      _
    $region7: #{tpu_custom_call.1} parent=1 // pred_check_branch
      %22 = sbr.rel (0) target = $region9
    $region8: #{tpu_custom_call.1} parent=1 // pred_region
      %24 = vsyncadd [#allocation6], 0
      %s26 = sshll.u32 %s1, 4
      %s27 = int_to_ptr.hbm [resolvable:$true] %s26
      %s28 = sshll.u32 [#allocation5], 4
      %s29 = int_to_ptr.vmem [resolvable:$true] %s28
      %31 = dma.hbm_to_vmem [thread:$0]  %s27, 32, %s29, [#allocation6]
    $region9: #{tpu_custom_call.1} parent=1 // pred_fallthru
      _
    // Predicated region
    $region10: #{tpu_custom_call.1} parent=1 // pred_check
      _
    $region11: #{tpu_custom_call.1} parent=1 // pred_check_branch
      %33 = sbr.rel (0) target = $region13
    $region12: #{tpu_custom_call.1} parent=1 // pred_region
      %35 = dma.done [#allocation3], 64
    $region13: #{tpu_custom_call.1} parent=1 // pred_fallthru
      _
    // Predicated region
    $region14: #{tpu_custom_call.1} parent=1 // pred_check
      _
    $region15: #{tpu_custom_call.1} parent=1 // pred_check_branch
      %37 = sbr.rel (0) target = $region17
    $region16: #{tpu_custom_call.1} parent=1 // pred_region
      %39 = dma.done [#allocation6], 32
    $region17: #{tpu_custom_call.1} parent=1 // pred_fallthru
      _
    %v40 = vld [vmem:[#allocation2] sm:$0xf]
    %v41 = vld [vmem:[#allocation5] sm:$0x1]
    %v42 = vld [vmem:[#allocation5 + $0x1] sm:$0x1]
    %v43 = vperm.slane %v41, 0
    %v44 = vmul.f32 %v40, %v43
    %v45 = vperm.slane %v42, 0
    %v46 = vadd.f32 %v44, %v45
    %47 = vst [vmem:[#allocation7] sm:$0xf] %v46
    // Predicated region
    $region18: #{tpu_custom_call.1} parent=1 // pred_check
      _
    $region19: #{tpu_custom_call.1} parent=1 // pred_check_branch
      %49 = sbr.rel (0) target = $region21
    $region20: #{tpu_custom_call.1} parent=1 // pred_region
      %51 = vsyncadd [#allocation4], 0
      %s53 = sshll.u32 [#allocation7], 4
      %s54 = int_to_ptr.vmem [resolvable:$true] %s53
      %s55 = sshll.u32 %s2, 4
      %s56 = int_to_ptr.hbm [resolvable:$true] %s55
      %58 = dma.vmem_to_hbm [thread:$0]  %s54, 64, %s56, [#allocation4]
    $region21: #{tpu_custom_call.1} parent=1 // pred_fallthru
      _
    // Predicated region
    $region22: #{tpu_custom_call.1} parent=1 // pred_check
      _
    $region23: #{tpu_custom_call.1} parent=1 // pred_check_branch
      %60 = sbr.rel (0) target = $region25
    $region24: #{tpu_custom_call.1} parent=1 // pred_region
      %62 = dma.done [#allocation4], 64
    $region25: #{tpu_custom_call.1} parent=1 // pred_fallthru
      _
    %63 = vsyncpa [#allocation3], 1
    %64 = vsyncpa [#allocation6], 1
    %65 = vsyncpa [#allocation4], 1

</llo_original>
